<compile_context>
chip_gen: v6e
topology: v6e:2x2x1
jax: 0.10.0
libtpu: 0.0.40
codegen_flags: <defaults>
</compile_context>

<pallas_src>
import jax
import jax.numpy as jnp
import numpy as np
from jax.experimental import pallas as pl
from jax.experimental.pallas import tpu as pltpu


def gru_seq_kernel(chars_ref,                       # SMEM (T,) int32 (scalar prefetch)
                   emb_ref, h0_ref,                 # VMEM-resident embedding / initial h
                   wzr_ref, bzr_ref,                # fused [Wz | Wr], [bz | br]
                   wh_ref, bh_ref,                  # candidate gate (acts on cat(rt*h, x))
                   wo_ref, bo_ref,                  # output head
                   out_ref, ht_ref,                 # outputs
                   xh_ref, rhx_ref):                # VMEM scratch: (1, 2H) each
    t = pl.program_id(0)
    H = h0_ref.shape[1]

    # Seed the carried hidden state (lanes [H:2H] of xh) on the first step only.
    @pl.when(t == 0)
    def _():
        xh_ref[:, H:] = h0_ref[...]

    h = xh_ref[:, H:]                               # (1, H) previous hidden state

    # In-kernel embedding lookup: dynamic row gather from the resident table.
    idx = chars_ref[t]
    x = emb_ref[pl.ds(idx, 1), :]                   # (1, H)
    xh_ref[:, :H] = x                               # xh = cat(x, h)

    # [zt | rt] = sigmoid(cat(x, h) @ [Wz | Wr] + [bz | br])   -- one fused matmul
    zr = jax.nn.sigmoid(
        jnp.dot(xh_ref[...], wzr_ref[...], preferred_element_type=jnp.float32)
        + bzr_ref[...])
    zt = zr[:, :H]
    rt = zr[:, H:]

    # h_tilde = tanh(cat(rt*h, x) @ W + bw)
    rhx_ref[:, :H] = rt * h
    rhx_ref[:, H:] = x
    h_tilde = jnp.tanh(
        jnp.dot(rhx_ref[...], wh_ref[...], preferred_element_type=jnp.float32)
        + bh_ref[...])

    # ht = (1 - zt) * h + zt * h_tilde
    ht = (1.0 - zt) * h + zt * h_tilde
    xh_ref[:, H:] = ht                              # carry to the next timestep

    # output = relu(ht @ Wo + bo)
    out_ref[...] = jnp.maximum(
        jnp.dot(ht, wo_ref[...], preferred_element_type=jnp.float32) + bo_ref[...],
        0.0)
    ht_ref[...] = ht


def init_params(key, input_size, hidden_size, output_size):
    """Deterministic parameter init mimicking PyTorch defaults (shapes only matter)."""
    H, V = hidden_size, output_size
    ks = jax.random.split(key, 9)

    def lin(kw, kb, fan_in, fan_out):
        bound = 1.0 / np.sqrt(fan_in)
        w = jax.random.uniform(kw, (fan_in, fan_out), jnp.float32, -bound, bound)
        b = jax.random.uniform(kb, (fan_out,), jnp.float32, -bound, bound)
        return w, b

    params = {}
    params["embedding"] = jax.random.normal(ks[0], (input_size, H), jnp.float32)
    params["wz"], params["bz"] = lin(ks[1], ks[2], 2 * H, H)
    params["wr"], params["br"] = lin(ks[3], ks[4], 2 * H, H)
    params["w"],  params["bw"] = lin(ks[5], ks[6], 2 * H, H)
    params["wo"], params["bo"] = lin(ks[7], ks[8], H, V)
    return params


def pack_params(params):
    """Pack weights once for the fused-kernel layout (y = x @ W + b convention)."""
    H = params["embedding"].shape[1]
    V = params["wo"].shape[1]
    return {
        "emb": params["embedding"].astype(jnp.float32),                  # (Vin, H)
        "wzr": jnp.concatenate([params["wz"], params["wr"]], axis=1),    # (2H, 2H)
        "bzr": jnp.concatenate([params["bz"], params["br"]]).reshape(1, 2 * H),
        "wh":  params["w"],                                              # (2H, H)
        "bh":  params["bw"].reshape(1, H),
        "wo":  params["wo"],                                             # (H, V)
        "bo":  params["bo"].reshape(1, V),
    }


def rnn_forward_seq(packed, chars, h0):
    """Run the GRU over a whole int32 character sequence in one pallas_call.

    Args:
      chars: (T,) int32 character ids.
      h0:    (1, H) float32 initial hidden state.
    Returns:
      out: (T, V) per-step relu(logits), ht: (1, H) final hidden state.
    """
    H = packed["emb"].shape[1]
    V = packed["wo"].shape[1]
    T = chars.shape[0]

    def resident(shape):
        # Same block at every timestep -> DMA'd once, stays in VMEM for the sequence.
        return pl.BlockSpec(shape, lambda t, c: (0,) * len(shape))

    ins = [packed["emb"], h0.astype(jnp.float32),
           packed["wzr"], packed["bzr"],
           packed["wh"], packed["bh"],
           packed["wo"], packed["bo"]]

    grid_spec = pltpu.PrefetchScalarGridSpec(
        num_scalar_prefetch=1,
        grid=(T,),
        in_specs=[resident(a.shape) for a in ins],
        out_specs=(
            # Per-step logits: one (1, V) row per grid step (leading seq dim squeezed).
            pl.BlockSpec((None, 1, V), lambda t, c: (t, 0, 0)),
            # Final hidden state: same block every step -> stays resident, written once.
            pl.BlockSpec((1, H), lambda t, c: (0, 0)),
        ),
        scratch_shapes=[pltpu.VMEM((1, 2 * H), jnp.float32),   # cat(x, h) (h carried here)
                        pltpu.VMEM((1, 2 * H), jnp.float32)],  # cat(rt*h, x)
    )

    out, ht = pl.pallas_call(
        gru_seq_kernel,
        grid_spec=grid_spec,
        out_shape=(jax.ShapeDtypeStruct((T, 1, V), jnp.float32),
                   jax.ShapeDtypeStruct((1, H), jnp.float32)),
        compiler_params=pltpu.CompilerParams(
            dimension_semantics=("arbitrary",)),   # sequential: hidden state is carried
    )(chars.astype(jnp.int32), *ins)
    return out.reshape(T, V), ht


def rnn_forward(packed, input_char, hidden_state):
    """Pallas equivalent of RNN.forward(input_char, hidden_state) (single step)."""
    H = packed["emb"].shape[1]
    V = packed["wo"].shape[1]
    chars = jnp.asarray([input_char], dtype=jnp.int32)
    out, ht = rnn_forward_seq(packed, chars, hidden_state.reshape(1, H))
    return out.reshape(1, 1, V), ht.reshape(1, 1, H)   # match PyTorch (1, 1, features)


def rnn_forward_ref(params, input_char, hidden_state):
    """Pure-JAX reference mirroring the PyTorch module exactly."""
    H = params["embedding"].shape[1]
    x = params["embedding"][input_char].reshape(1, 1, H)
    h = hidden_state
    cat_xh = jnp.concatenate([x, h], axis=2)
    zt = jax.nn.sigmoid(cat_xh @ params["wz"] + params["bz"])
    rt = jax.nn.sigmoid(cat_xh @ params["wr"] + params["br"])
    cat_rh_x = jnp.concatenate([rt * h, x], axis=2)
    h_tilde = jnp.tanh(cat_rh_x @ params["w"] + params["bw"])
    ht = (1.0 - zt) * h + zt * h_tilde
    out = jnp.maximum(ht @ params["wo"] + params["bo"], 0.0)
    return out, ht


if __name__ == "__main__":
    input_size = 16     # alphabet size (== output_size)
    hidden_size = 32
    output_size = 16
    n_layers = 1

    key = jax.random.PRNGKey(0)
    pkey, hkey, ckey = jax.random.split(key, 3)
    params = init_params(pkey, input_size, hidden_size, output_size)
    packed = pack_params(params)

    # --- single-step forward: matches RNN.forward(input_char, hidden_state) ---
    input_char = 3
    hidden_state = 0.1 * jax.random.normal(
        hkey, (n_layers, 1, hidden_size), jnp.float32)

    out, hidden = rnn_forward(packed, input_char, hidden_state)
    out = jax.block_until_ready(out)
    hidden = jax.block_until_ready(hidden)

    out_ref, hidden_ref = rnn_forward_ref(params, input_char, hidden_state)
    assert out.shape == (1, 1, output_size) and hidden.shape == (1, 1, hidden_size)
    np.testing.assert_allclose(np.asarray(out), np.asarray(out_ref),
                               rtol=1e-5, atol=1e-5)
    np.testing.assert_allclose(np.asarray(hidden), np.asarray(hidden_ref),
                               rtol=1e-5, atol=1e-5)

    # --- full sequence in one kernel: weights stay VMEM-resident across 8 steps ---
    T = 8
    chars = jax.random.randint(ckey, (T,), 0, input_size, dtype=jnp.int32)
    h0 = jnp.zeros((n_layers, 1, hidden_size), jnp.float32)   # == RNN.init_hidden()

    out_seq, ht_seq = rnn_forward_seq(packed, chars, h0.reshape(1, hidden_size))
    out_seq = jax.block_until_ready(out_seq)
    ht_seq = jax.block_until_ready(ht_seq)

    h_ref = h0
    outs_ref = []
    for t in range(T):
        o, h_ref = rnn_forward_ref(params, int(chars[t]), h_ref)
        outs_ref.append(o.reshape(output_size))
    outs_ref = jnp.stack(outs_ref)

    np.testing.assert_allclose(np.asarray(out_seq), np.asarray(outs_ref),
                               rtol=1e-5, atol=1e-5)
    np.testing.assert_allclose(np.asarray(ht_seq.reshape(1, 1, hidden_size)),
                               np.asarray(h_ref), rtol=1e-5, atol=1e-5)
    print("KERNEL_OK")
</pallas_src>

<mosaic_0001>
module attributes {stable_mosaic.version = 11 : i64} {
  func.func @gru_seq_kernel(%arg0: i32, %arg1: memref<1xi32, #tpu.memory_space<smem>>, %arg2: memref<16x32xf32, #tpu.memory_space<vmem>>, %arg3: memref<1x32xf32, #tpu.memory_space<vmem>>, %arg4: memref<64x64xf32, #tpu.memory_space<vmem>>, %arg5: memref<1x64xf32, #tpu.memory_space<vmem>>, %arg6: memref<64x32xf32, #tpu.memory_space<vmem>>, %arg7: memref<1x32xf32, #tpu.memory_space<vmem>>, %arg8: memref<32x16xf32, #tpu.memory_space<vmem>>, %arg9: memref<1x16xf32, #tpu.memory_space<vmem>>, %arg10: memref<1x1x16xf32, #tpu.memory_space<vmem>>, %arg11: memref<1x32xf32, #tpu.memory_space<vmem>>, %arg12: memref<1x64xf32, #tpu.memory_space<vmem>>, %arg13: memref<1x64xf32, #tpu.memory_space<vmem>>) attributes {dimension_semantics = [#tpu.dimension_semantics<arbitrary>], iteration_bounds = array<i64: 1>, scalar_prefetch = 1 : i64, scratch_operands = 2 : i64, tpu.core_type = #tpu.core_type<tc>, window_params = [{pipeline_mode = #tpu.pipeline_mode<synchronous>, transform_indices = @transform_0, window_bounds = array<i64: 16, 32>}, {pipeline_mode = #tpu.pipeline_mode<synchronous>, transform_indices = @transform_1, window_bounds = array<i64: 1, 32>}, {pipeline_mode = #tpu.pipeline_mode<synchronous>, transform_indices = @transform_2, window_bounds = array<i64: 64, 64>}, {pipeline_mode = #tpu.pipeline_mode<synchronous>, transform_indices = @transform_3, window_bounds = array<i64: 1, 64>}, {pipeline_mode = #tpu.pipeline_mode<synchronous>, transform_indices = @transform_4, window_bounds = array<i64: 64, 32>}, {pipeline_mode = #tpu.pipeline_mode<synchronous>, transform_indices = @transform_5, window_bounds = array<i64: 1, 32>}, {pipeline_mode = #tpu.pipeline_mode<synchronous>, transform_indices = @transform_6, window_bounds = array<i64: 32, 16>}, {pipeline_mode = #tpu.pipeline_mode<synchronous>, transform_indices = @transform_7, window_bounds = array<i64: 1, 16>}, {transform_indices = @transform_8, window_bounds = array<i64: 1, 1, 16>}, {pipeline_mode = #tpu.pipeline_mode<synchronous>, transform_indices = @transform_9, window_bounds = array<i64: 1, 32>}]} {
    %c0_i32 = arith.constant 0 : i32
    %0 = arith.cmpi eq, %arg0, %c0_i32 : i32
    %1 = arith.extui %0 : i1 to i32
    %c0_i32_0 = arith.constant 0 : i32
    %2 = arith.cmpi ne, %1, %c0_i32_0 : i32
    scf.if %2 {
      %c0_36 = arith.constant 0 : index
      %c0_37 = arith.constant 0 : index
      %46 = vector.load %arg3[%c0_36, %c0_37] : memref<1x32xf32, #tpu.memory_space<vmem>>, vector<1x32xf32>
      %c0_38 = arith.constant 0 : index
      %c32_39 = arith.constant 32 : index
      %47 = vector.load %arg12[%c0_38, %c32_39] : memref<1x64xf32, #tpu.memory_space<vmem>>, vector<1x32xf32>
      tpu.vector_store %arg12[%c0_38, %c32_39], %46 {strides = array<i32>} : memref<1x64xf32, #tpu.memory_space<vmem>>, vector<1x32xf32>,
    } else {
    }
    %c0 = arith.constant 0 : index
    %c32 = arith.constant 32 : index
    %3 = vector.load %arg12[%c0, %c32] : memref<1x64xf32, #tpu.memory_space<vmem>>, vector<1x32xf32>
    %4 = arith.index_cast %arg0 : i32 to index
    %5 = memref.load %arg1[%4] : memref<1xi32, #tpu.memory_space<smem>>
    %6 = arith.index_cast %5 : i32 to index
    %c0_1 = arith.constant 0 : index
    %7 = vector.load %arg2[%6, %c0_1] : memref<16x32xf32, #tpu.memory_space<vmem>>, vector<1x32xf32>
    %c0_2 = arith.constant 0 : index
    %c0_3 = arith.constant 0 : index
    %8 = vector.load %arg12[%c0_2, %c0_3] : memref<1x64xf32, #tpu.memory_space<vmem>>, vector<1x32xf32>
    tpu.vector_store %arg12[%c0_2, %c0_3], %7 {strides = array<i32>} : memref<1x64xf32, #tpu.memory_space<vmem>>, vector<1x32xf32>,
    %c0_4 = arith.constant 0 : index
    %c0_5 = arith.constant 0 : index
    %9 = vector.load %arg12[%c0_4, %c0_5] : memref<1x64xf32, #tpu.memory_space<vmem>>, vector<1x64xf32>
    %c0_6 = arith.constant 0 : index
    %c0_7 = arith.constant 0 : index
    %10 = vector.load %arg4[%c0_6, %c0_7] : memref<64x64xf32, #tpu.memory_space<vmem>>, vector<64x64xf32>
    %cst = arith.constant dense<0.000000e+00> : vector<1x64xf32>
    %11 = tpu.matmul %9, %10, %cst {dimension_numbers = #tpu.dot_dimension_numbers<[1], [0], [0], [1], [0, 0, 1, 1], [], []>} : vector<1x64xf32>, vector<64x64xf32>, vector<1x64xf32> -> vector<1x64xf32>
    %c0_8 = arith.constant 0 : index
    %c0_9 = arith.constant 0 : index
    %12 = vector.load %arg5[%c0_8, %c0_9] : memref<1x64xf32, #tpu.memory_space<vmem>>, vector<1x64xf32>
    %13 = arith.addf %11, %12 : vector<1x64xf32>
    %14 = arith.negf %13 : vector<1x64xf32>
    %15 = math.exp %14 : vector<1x64xf32>
    %cst_10 = arith.constant 1.000000e+00 : f32
    %16 = vector.broadcast %cst_10 : f32 to vector<1x64xf32>
    %17 = arith.addf %16, %15 : vector<1x64xf32>
    %18 = arith.divf %16, %17 : vector<1x64xf32>
    %19 = vector.extract_strided_slice %18 {offsets = [0, 0], sizes = [1, 32], strides = [1, 1]} : vector<1x64xf32> to vector<1x32xf32>
    %20 = vector.extract_strided_slice %18 {offsets = [0, 32], sizes = [1, 32], strides = [1, 1]} : vector<1x64xf32> to vector<1x32xf32>
    %21 = arith.mulf %20, %3 : vector<1x32xf32>
    %c0_11 = arith.constant 0 : index
    %c0_12 = arith.constant 0 : index
    %22 = vector.load %arg13[%c0_11, %c0_12] : memref<1x64xf32, #tpu.memory_space<vmem>>, vector<1x32xf32>
    tpu.vector_store %arg13[%c0_11, %c0_12], %21 {strides = array<i32>} : memref<1x64xf32, #tpu.memory_space<vmem>>, vector<1x32xf32>,
    %c0_13 = arith.constant 0 : index
    %c32_14 = arith.constant 32 : index
    %23 = vector.load %arg13[%c0_13, %c32_14] : memref<1x64xf32, #tpu.memory_space<vmem>>, vector<1x32xf32>
    tpu.vector_store %arg13[%c0_13, %c32_14], %7 {strides = array<i32>} : memref<1x64xf32, #tpu.memory_space<vmem>>, vector<1x32xf32>,
    %c0_15 = arith.constant 0 : index
    %c0_16 = arith.constant 0 : index
    %24 = vector.load %arg13[%c0_15, %c0_16] : memref<1x64xf32, #tpu.memory_space<vmem>>, vector<1x64xf32>
    %c0_17 = arith.constant 0 : index
    %c0_18 = arith.constant 0 : index
    %25 = vector.load %arg6[%c0_17, %c0_18] : memref<64x32xf32, #tpu.memory_space<vmem>>, vector<64x32xf32>
    %cst_19 = arith.constant dense<0.000000e+00> : vector<1x32xf32>
    %26 = tpu.matmul %24, %25, %cst_19 {dimension_numbers = #tpu.dot_dimension_numbers<[1], [0], [0], [1], [0, 0, 1, 1], [], []>} : vector<1x64xf32>, vector<64x32xf32>, vector<1x32xf32> -> vector<1x32xf32>
    %c0_20 = arith.constant 0 : index
    %c0_21 = arith.constant 0 : index
    %27 = vector.load %arg7[%c0_20, %c0_21] : memref<1x32xf32, #tpu.memory_space<vmem>>, vector<1x32xf32>
    %28 = arith.addf %26, %27 : vector<1x32xf32>
    %29 = math.tanh %28 : vector<1x32xf32>
    %cst_22 = arith.constant 1.000000e+00 : f32
    %30 = vector.broadcast %cst_22 : f32 to vector<1x32xf32>
    %31 = arith.subf %30, %19 : vector<1x32xf32>
    %32 = arith.mulf %31, %3 : vector<1x32xf32>
    %33 = arith.mulf %19, %29 : vector<1x32xf32>
    %34 = arith.addf %32, %33 : vector<1x32xf32>
    %c0_23 = arith.constant 0 : index
    %c32_24 = arith.constant 32 : index
    %35 = vector.load %arg12[%c0_23, %c32_24] : memref<1x64xf32, #tpu.memory_space<vmem>>, vector<1x32xf32>
    tpu.vector_store %arg12[%c0_23, %c32_24], %34 {strides = array<i32>} : memref<1x64xf32, #tpu.memory_space<vmem>>, vector<1x32xf32>,
    %c0_25 = arith.constant 0 : index
    %c0_26 = arith.constant 0 : index
    %36 = vector.load %arg8[%c0_25, %c0_26] : memref<32x16xf32, #tpu.memory_space<vmem>>, vector<32x16xf32>
    %cst_27 = arith.constant dense<0.000000e+00> : vector<1x16xf32>
    %37 = tpu.matmul %34, %36, %cst_27 {dimension_numbers = #tpu.dot_dimension_numbers<[1], [0], [0], [1], [0, 0, 1, 1], [], []>} : vector<1x32xf32>, vector<32x16xf32>, vector<1x16xf32> -> vector<1x16xf32>
    %c0_28 = arith.constant 0 : index
    %c0_29 = arith.constant 0 : index
    %38 = vector.load %arg9[%c0_28, %c0_29] : memref<1x16xf32, #tpu.memory_space<vmem>>, vector<1x16xf32>
    %39 = arith.addf %37, %38 : vector<1x16xf32>
    %cst_30 = arith.constant 0.000000e+00 : f32
    %40 = vector.broadcast %cst_30 : f32 to vector<1x16xf32>
    %41 = arith.maximumf %39, %40 : vector<1x16xf32>
    %c0_31 = arith.constant 0 : index
    %c0_32 = arith.constant 0 : index
    %c0_33 = arith.constant 0 : index
    %42 = vector.load %arg10[%c0_31, %c0_32, %c0_33] : memref<1x1x16xf32, #tpu.memory_space<vmem>>, vector<1x1x16xf32>
    %43 = vector.shape_cast %42 : vector<1x1x16xf32> to vector<1x16xf32>
    %44 = vector.shape_cast %41 : vector<1x16xf32> to vector<1x1x16xf32>
    tpu.vector_store %arg10[%c0_31, %c0_32, %c0_33], %44 {strides = array<i32>} : memref<1x1x16xf32, #tpu.memory_space<vmem>>, vector<1x1x16xf32>,
    %c0_34 = arith.constant 0 : index
    %c0_35 = arith.constant 0 : index
    %45 = vector.load %arg11[%c0_34, %c0_35] : memref<1x32xf32, #tpu.memory_space<vmem>>, vector<1x32xf32>
    tpu.vector_store %arg11[%c0_34, %c0_35], %34 {strides = array<i32>} : memref<1x32xf32, #tpu.memory_space<vmem>>, vector<1x32xf32>,
    return
  }
  func.func @transform_0(%arg0: i32, %arg1: memref<1xi32, #tpu.memory_space<smem>>) -> (i32, i32) {
    %c0_i32 = arith.constant 0 : i32
    %c0_i32_0 = arith.constant 0 : i32
    %c0_i32_1 = arith.constant 0 : i32
    return %c0_i32, %c0_i32_0 : i32, i32
  }
  func.func @transform_1(%arg0: i32, %arg1: memref<1xi32, #tpu.memory_space<smem>>) -> (i32, i32) {
    %c0_i32 = arith.constant 0 : i32
    %c0_i32_0 = arith.constant 0 : i32
    %c0_i32_1 = arith.constant 0 : i32
    return %c0_i32, %c0_i32_0 : i32, i32
  }
  func.func @transform_2(%arg0: i32, %arg1: memref<1xi32, #tpu.memory_space<smem>>) -> (i32, i32) {
    %c0_i32 = arith.constant 0 : i32
    %c0_i32_0 = arith.constant 0 : i32
    %c0_i32_1 = arith.constant 0 : i32
    return %c0_i32, %c0_i32_0 : i32, i32
  }
  func.func @transform_3(%arg0: i32, %arg1: memref<1xi32, #tpu.memory_space<smem>>) -> (i32, i32) {
    %c0_i32 = arith.constant 0 : i32
    %c0_i32_0 = arith.constant 0 : i32
    %c0_i32_1 = arith.constant 0 : i32
    return %c0_i32, %c0_i32_0 : i32, i32
  }
  func.func @transform_4(%arg0: i32, %arg1: memref<1xi32, #tpu.memory_space<smem>>) -> (i32, i32) {
    %c0_i32 = arith.constant 0 : i32
    %c0_i32_0 = arith.constant 0 : i32
    %c0_i32_1 = arith.constant 0 : i32
    return %c0_i32, %c0_i32_0 : i32, i32
  }
  func.func @transform_5(%arg0: i32, %arg1: memref<1xi32, #tpu.memory_space<smem>>) -> (i32, i32) {
    %c0_i32 = arith.constant 0 : i32
    %c0_i32_0 = arith.constant 0 : i32
    %c0_i32_1 = arith.constant 0 : i32
    return %c0_i32, %c0_i32_0 : i32, i32
  }
  func.func @transform_6(%arg0: i32, %arg1: memref<1xi32, #tpu.memory_space<smem>>) -> (i32, i32) {
    %c0_i32 = arith.constant 0 : i32
    %c0_i32_0 = arith.constant 0 : i32
    %c0_i32_1 = arith.constant 0 : i32
    return %c0_i32, %c0_i32_0 : i32, i32
  }
  func.func @transform_7(%arg0: i32, %arg1: memref<1xi32, #tpu.memory_space<smem>>) -> (i32, i32) {
    %c0_i32 = arith.constant 0 : i32
    %c0_i32_0 = arith.constant 0 : i32
    %c0_i32_1 = arith.constant 0 : i32
    return %c0_i32, %c0_i32_0 : i32, i32
  }
  func.func @transform_8(%arg0: i32, %arg1: memref<1xi32, #tpu.memory_space<smem>>) -> (i32, i32, i32) {
    %c0_i32 = arith.constant 0 : i32
    %c0_i32_0 = arith.constant 0 : i32
    %c0_i32_1 = arith.constant 0 : i32
    return %arg0, %c0_i32, %c0_i32_0 : i32, i32, i32
  }
  func.func @transform_9(%arg0: i32, %arg1: memref<1xi32, #tpu.memory_space<smem>>) -> (i32, i32) {
    %c0_i32 = arith.constant 0 : i32
    %c0_i32_0 = arith.constant 0 : i32
    %c0_i32_1 = arith.constant 0 : i32
    return %c0_i32, %c0_i32_0 : i32, i32
  }
}

</mosaic_0001>

<llo_original>
// kernel: tpu_custom_call.1
$region0: #{tpu_custom_call.1}
  #allocation0 [shape = 'u32[]', space=smem, size = 0x4, offset = 0x4, fixed_abs, tag = 'smem constant byte address 0x4 - core index']
  #allocation1 [shape = 'u32[144,128]{1,0:T(1,128)}', space=vmem, size = 0x12000, scoped, tag = 'internal scratch']
  #allocation2 [shape = 'f32[1,64]{1,0:T(1,128)}', space=vmem, size = 0x200, scoped, tag = 'scratch operand']
  #allocation3 [shape = 'f32[1,64]{1,0:T(1,128)}', space=vmem, size = 0x200, scoped, tag = 'scratch operand']
  #allocation4 [shape = 's32[1]{0}', space=sflag, size = 0x4, scoped, tag = 'scoped memory for tpu_custom_call.1']
  #allocation5 [shape = 's32[1]{0:T(128)S(6)}', space=smem, size = 0x200, scoped, tag = 'prefetched SMEM operand 0']
  %s0 = inlined_call_operand.<no memory space> [shape: s32[1], index: 0, kind: input, shape index: {}]
  %s1 = inlined_call_operand.vmem [shape: f32[16,32], index: 1, kind: input, shape index: {}]
  %s2 = inlined_call_operand.vmem [shape: f32[1,32], index: 2, kind: input, shape index: {}]
  %s3 = inlined_call_operand.vmem [shape: f32[64,64], index: 3, kind: input, shape index: {}]
  %s4 = inlined_call_operand.vmem [shape: f32[1,64], index: 4, kind: input, shape index: {}]
  %s5 = inlined_call_operand.vmem [shape: f32[64,32], index: 5, kind: input, shape index: {}]
  %s6 = inlined_call_operand.vmem [shape: f32[1,32], index: 6, kind: input, shape index: {}]
  %s7 = inlined_call_operand.vmem [shape: f32[32,16], index: 7, kind: input, shape index: {}]
  %s8 = inlined_call_operand.vmem [shape: f32[1,16], index: 8, kind: input, shape index: {}]
  %s9 = inlined_call_operand.hbm [shape: f32[1,1,16], index: 9, kind: output, shape index: {0}]
  %s10 = inlined_call_operand.hbm [shape: f32[1,32], index: 10, kind: output, shape index: {1}]
  %11 = xla_tuple %s9, %s10
  %s12 = sld [smem:[#allocation0]]
  $region54: #{tpu_custom_call.1} parent=0
    _
  %s14 = ssub.s32 1, %s12
  %s15 = scalar_select 0, %s14, %s12
  %16 = sst [smem:[#allocation5]] %s0
  $region1: #{tpu_custom_call.1} parent=0
    #allocation6 [shape = 'u8[512]{0}', space=vmem, size = 0x400, scoped, tag = 'output window, operand 0, single buffered']
    #allocation7 [shape = 's32[1]{0}', space=sflag, size = 0x4, scoped, tag = 'scoped memory for tpu_custom_call.1']
    #allocation8 [shape = 'u8[512]{0}', space=vmem, size = 0x400, scoped, tag = 'output window, operand 1, single buffered']
    #allocation9 [shape = 's32[1]{0}', space=sflag, size = 0x4, scoped, tag = 'scoped memory for tpu_custom_call.1']
    %17 = vsyncpa [#allocation7], 0
    %18 = vsyncpa [#allocation9], 0
    // Predicated region
    $region2: #{tpu_custom_call.1} parent=1 // pred_check
      _
    $region3: #{tpu_custom_call.1} parent=1 // pred_check_branch
      %20 = sbr.rel (0) target = $region5
    $region4: #{tpu_custom_call.1} parent=1 // pred_region
      _
    $region5: #{tpu_custom_call.1} parent=1 // pred_fallthru
      _
    // Predicated region
    $region6: #{tpu_custom_call.1} parent=1 // pred_check
      _
    $region7: #{tpu_custom_call.1} parent=1 // pred_check_branch
      %22 = sbr.rel (0) target = $region9
    $region8: #{tpu_custom_call.1} parent=1 // pred_region
      _
    $region9: #{tpu_custom_call.1} parent=1 // pred_fallthru
      _
    // Predicated region
    $region10: #{tpu_custom_call.1} parent=1 // pred_check
      _
    $region11: #{tpu_custom_call.1} parent=1 // pred_check_branch
      %24 = sbr.rel (0) target = $region13
    $region12: #{tpu_custom_call.1} parent=1 // pred_region
      _
    $region13: #{tpu_custom_call.1} parent=1 // pred_fallthru
      _
    // Predicated region
    $region14: #{tpu_custom_call.1} parent=1 // pred_check
      _
    $region15: #{tpu_custom_call.1} parent=1 // pred_check_branch
      %26 = sbr.rel (0) target = $region17
    $region16: #{tpu_custom_call.1} parent=1 // pred_region
      _
    $region17: #{tpu_custom_call.1} parent=1 // pred_fallthru
      _
    // Predicated region
    $region18: #{tpu_custom_call.1} parent=1 // pred_check
      _
    $region19: #{tpu_custom_call.1} parent=1 // pred_check_branch
      %28 = sbr.rel (0) target = $region21
    $region20: #{tpu_custom_call.1} parent=1 // pred_region
      _
    $region21: #{tpu_custom_call.1} parent=1 // pred_fallthru
      _
    // Predicated region
    $region22: #{tpu_custom_call.1} parent=1 // pred_check
      _
    $region23: #{tpu_custom_call.1} parent=1 // pred_check_branch
      %30 = sbr.rel (0) target = $region25
    $region24: #{tpu_custom_call.1} parent=1 // pred_region
      _
    $region25: #{tpu_custom_call.1} parent=1 // pred_fallthru
      _
    // Predicated region
    $region26: #{tpu_custom_call.1} parent=1 // pred_check
      _
    $region27: #{tpu_custom_call.1} parent=1 // pred_check_branch
      %32 = sbr.rel (0) target = $region29
    $region28: #{tpu_custom_call.1} parent=1 // pred_region
      _
    $region29: #{tpu_custom_call.1} parent=1 // pred_fallthru
      _
    // Predicated region
    $region30: #{tpu_custom_call.1} parent=1 // pred_check
      _
    $region31: #{tpu_custom_call.1} parent=1 // pred_check_branch
      %34 = sbr.rel (0) target = $region33
    $region32: #{tpu_custom_call.1} parent=1 // pred_region
      _
    $region33: #{tpu_custom_call.1} parent=1 // pred_fallthru
      _
    %p35 = scmp.eq.s32.totalorder 0, 0
    // Predicated region
    $region34: #{tpu_custom_call.1} parent=1 // pred_check
      %p36 = pneg %p35
    $region35: #{tpu_custom_call.1} parent=1 // pred_check_branch
      %38 = sbr.rel (%p36) target = $region37
    $region36: #{tpu_custom_call.1} parent=1 // pred_region
      %v39 = vld [vmem:[%s2] sm:$0x1]
      %v41 = vlaneseq
      %v42 = vshrl.u32 %v41, 7
      %v43 = vsub.s32 0, %v42
      %v44 = vrot.slane %v39, %v43
      %45 = vrot.lane.b32.xlu0 %v44, 32
      %v46 = vpop.permute.xlu0 %45
      %vm48 = vcmask 516352
      %49 = vst.msk [vmem:[#allocation2] sm:$0x1] %vm48, %v46
    $region37: #{tpu_custom_call.1} parent=1 // pred_fallthru
      _
    %v50 = vld [vmem:[#allocation2] sm:$0x1]
    %s51 = sld [smem:[#allocation5]]
    %s52 = scalar_lea.vmem %s1, %s51
    %v53 = vld [vmem:[%s52] sm:$0x1]
    %vm54 = vcmask 253952
    %55 = vst.msk [vmem:[#allocation2] sm:$0x1] %vm54, %v53
    %v56 = vld [vmem:[#allocation2] sm:$0x1]
    %v57 = vld [vmem:[%s3] sm:$0xff]
    %v58 = vld [vmem:[%s3 + $0x8] sm:$0xff]
    %v59 = vld [vmem:[%s3 + $0x10] sm:$0xff]
    %v60 = vld [vmem:[%s3 + $0x18] sm:$0xff]
    %v61 = vld [vmem:[%s3 + $0x20] sm:$0xff]
    %v62 = vld [vmem:[%s3 + $0x28] sm:$0xff]
    %v63 = vld [vmem:[%s3 + $0x30] sm:$0xff]
    %v64 = vld [vmem:[%s3 + $0x38] sm:$0xff]
    %v65 = vld [vmem:[%s4] sm:$0x1]
    %vm66 = vcmask 523264
    %v68 = vsel %vm66, %v56, 0
    %70 = vmatprep.subr.mxu0 0.0
    %71 = vmatpush1.msra.mxu0 0.0
    %72 = vmatprep.subr.mxu0 0.0
    %73 = vmatpush1.msra.mxu0 0.0
    %74 = vmatprep.subr.mxu0 0.0
    %75 = vmatpush1.msra.mxu0 0.0
    %76 = vmatprep.subr.mxu0 0.0
    %77 = vmatpush1.msra.mxu0 0.0
    %78 = vmatprep.subr.mxu0 0.0
    %79 = vmatpush1.msra.mxu0 0.0
    %80 = vmatprep.subr.mxu0 0.0
    %81 = vmatpush1.msra.mxu0 0.0
    %82 = vmatprep.subr.mxu0 0.0
    %83 = vmatpush1.msra.mxu0 0.0
    %84 = vmatprep.subr.mxu0 0.0
    %85 = vmatpush1.msra.mxu0 0.0
    %86 = vmatprep.subr.mxu0 0.0
    %87 = vmatpush1.msra.mxu0 %v64
    %88 = vmatprep.subr.mxu0 0.0
    %89 = vmatpush1.msra.mxu0 %v63
    %90 = vmatprep.subr.mxu0 0.0
    %91 = vmatpush1.msra.mxu0 %v62
    %92 = vmatprep.subr.mxu0 0.0
    %93 = vmatpush1.msra.mxu0 %v61
    %94 = vmatprep.subr.mxu0 0.0
    %95 = vmatpush1.msra.mxu0 %v60
    %96 = vmatprep.subr.mxu0 0.0
    %97 = vmatpush1.msra.mxu0 %v59
    %98 = vmatprep.subr.mxu0 0.0
    %99 = vmatpush1.msra.mxu0 %v58
    %100 = vmatprep.subr.mxu0 0.0
    %101 = vmatpush1.msra.mxu0 %v57
    %102 = vmatprep.subr.mxu0 0.0
    %103 = vmatpush2.msra.mxu0 0.0
    %104 = vmatprep.subr.mxu0 0.0
    %105 = vmatpush2.msra.mxu0 0.0
    %106 = vmatprep.subr.mxu0 0.0
    %107 = vmatpush2.msra.mxu0 0.0
    %108 = vmatprep.subr.mxu0 0.0
    %109 = vmatpush2.msra.mxu0 0.0
    %110 = vmatprep.subr.mxu0 0.0
    %111 = vmatpush2.msra.mxu0 0.0
    %112 = vmatprep.subr.mxu0 0.0
    %113 = vmatpush2.msra.mxu0 0.0
    %114 = vmatprep.subr.mxu0 0.0
    %115 = vmatpush2.msra.mxu0 0.0
    %116 = vmatprep.subr.mxu0 0.0
    %117 = vmatpush2.msra.mxu0 0.0
    %118 = vmatprep.subr.mxu0 0.0
    %119 = vmatpush2.msra.mxu0 0.0
    %120 = vmatprep.subr.mxu0 0.0
    %121 = vmatpush2.msra.mxu0 0.0
    %122 = vmatprep.subr.mxu0 0.0
    %123 = vmatpush2.msra.mxu0 0.0
    %124 = vmatprep.subr.mxu0 0.0
    %125 = vmatpush2.msra.mxu0 0.0
    %126 = vmatprep.subr.mxu0 0.0
    %127 = vmatpush2.msra.mxu0 0.0
    %128 = vmatprep.subr.mxu0 0.0
    %129 = vmatpush2.msra.mxu0 0.0
    %130 = vmatprep.subr.mxu0 0.0
    %131 = vmatpush2.msra.mxu0 0.0
    %132 = vmatprep.subr.mxu0 0.0
    %133 = vmatpush2.msra.mxu0 0.0
    %134 = vmatprep.mubr.f32.mxu0 0.0
    %135 = vmatmul.mubr.f32.gmra.mxu0 %v68
    %v136 = vpop.f32.mrf.mxu0
    %v137 = vadd.f32 %v65, %v136
    %v138 = vpop.f32.mrf.mxu0
    %139 = vdwg.mxu0
    %v140 = vxor.u32 %v137, 2147483648
    %v141 = vmul.f32 %v140, 1.442695
    %v142 = vpow.pop %v141
    %v143 = vadd.f32 %v142, 1.0
    %v144 = vrcp.pop %v143
    %v145 = vmul.f32 1.0, %v144
    %v146 = vmul.f32 %v145, %v50
    %148 = vrot.lane.b32.xlu0 %v146, 96
    %v149 = vpop.permute.xlu0 %148
    %151 = vst.msk [vmem:[#allocation3] sm:$0x1] %vm54, %v149
    %153 = vrot.lane.b32.xlu0 %v53, 32
    %v154 = vpop.permute.xlu0 %153
    %vm156 = vcmask 516352
    %157 = vst.msk [vmem:[#allocation3] sm:$0x1] %vm156, %v154
    %v158 = vld [vmem:[#allocation3] sm:$0x1]
    %v159 = vld [vmem:[%s5] sm:$0xff]
    %v160 = vld [vmem:[%s5 + $0x8] sm:$0xff]
    %v161 = vld [vmem:[%s5 + $0x10] sm:$0xff]
    %v162 = vld [vmem:[%s5 + $0x18] sm:$0xff]
    %v163 = vld [vmem:[%s5 + $0x20] sm:$0xff]
    %v164 = vld [vmem:[%s5 + $0x28] sm:$0xff]
    %v165 = vld [vmem:[%s5 + $0x30] sm:$0xff]
    %v166 = vld [vmem:[%s5 + $0x38] sm:$0xff]
    %v167 = vld [vmem:[%s6] sm:$0x1]
    %v169 = vsel %vm66, %v158, 0
    %171 = vmatprep.subr.mxu0 0.0
    %172 = vmatpush1.msra.mxu0 0.0
    %173 = vmatprep.subr.mxu0 0.0
    %174 = vmatpush1.msra.mxu0 0.0
    %175 = vmatprep.subr.mxu0 0.0
    %176 = vmatpush1.msra.mxu0 0.0
    %177 = vmatprep.subr.mxu0 0.0
    %178 = vmatpush1.msra.mxu0 0.0
    %179 = vmatprep.subr.mxu0 0.0
    %180 = vmatpush1.msra.mxu0 0.0
    %181 = vmatprep.subr.mxu0 0.0
    %182 = vmatpush1.msra.mxu0 0.0
    %183 = vmatprep.subr.mxu0 0.0
    %184 = vmatpush1.msra.mxu0 0.0
    %185 = vmatprep.subr.mxu0 0.0
    %186 = vmatpush1.msra.mxu0 0.0
    %187 = vmatprep.subr.mxu0 0.0
    %188 = vmatpush1.msra.mxu0 %v166
    %189 = vmatprep.subr.mxu0 0.0
    %190 = vmatpush1.msra.mxu0 %v165
    %191 = vmatprep.subr.mxu0 0.0
    %192 = vmatpush1.msra.mxu0 %v164
    %193 = vmatprep.subr.mxu0 0.0
    %194 = vmatpush1.msra.mxu0 %v163
    %195 = vmatprep.subr.mxu0 0.0
    %196 = vmatpush1.msra.mxu0 %v162
    %197 = vmatprep.subr.mxu0 0.0
    %198 = vmatpush1.msra.mxu0 %v161
    %199 = vmatprep.subr.mxu0 0.0
    %200 = vmatpush1.msra.mxu0 %v160
    %201 = vmatprep.subr.mxu0 0.0
    %202 = vmatpush1.msra.mxu0 %v159
    %203 = vmatprep.subr.mxu0 0.0
    %204 = vmatpush2.msra.mxu0 0.0
    %205 = vmatprep.subr.mxu0 0.0
    %206 = vmatpush2.msra.mxu0 0.0
    %207 = vmatprep.subr.mxu0 0.0
    %208 = vmatpush2.msra.mxu0 0.0
    %209 = vmatprep.subr.mxu0 0.0
    %210 = vmatpush2.msra.mxu0 0.0
    %211 = vmatprep.subr.mxu0 0.0
    %212 = vmatpush2.msra.mxu0 0.0
    %213 = vmatprep.subr.mxu0 0.0
    %214 = vmatpush2.msra.mxu0 0.0
    %215 = vmatprep.subr.mxu0 0.0
    %216 = vmatpush2.msra.mxu0 0.0
    %217 = vmatprep.subr.mxu0 0.0
    %218 = vmatpush2.msra.mxu0 0.0
    %219 = vmatprep.subr.mxu0 0.0
    %220 = vmatpush2.msra.mxu0 0.0
    %221 = vmatprep.subr.mxu0 0.0
    %222 = vmatpush2.msra.mxu0 0.0
    %223 = vmatprep.subr.mxu0 0.0
    %224 = vmatpush2.msra.mxu0 0.0
    %225 = vmatprep.subr.mxu0 0.0
    %226 = vmatpush2.msra.mxu0 0.0
    %227 = vmatprep.subr.mxu0 0.0
    %228 = vmatpush2.msra.mxu0 0.0
    %229 = vmatprep.subr.mxu0 0.0
    %230 = vmatpush2.msra.mxu0 0.0
    %231 = vmatprep.subr.mxu0 0.0
    %232 = vmatpush2.msra.mxu0 0.0
    %233 = vmatprep.subr.mxu0 0.0
    %234 = vmatpush2.msra.mxu0 0.0
    %235 = vmatprep.mubr.f32.mxu0 0.0
    %236 = vmatmul.mubr.f32.gmra.mxu0 %v169
    %v237 = vpop.f32.mrf.mxu0
    %v238 = vadd.f32 %v167, %v237
    %v239 = vpop.f32.mrf.mxu0
    %240 = vdwg.mxu0
    %v241 = vtanh.pop %v238
    %v242 = vsub.f32 1.0, %v145
    %v244 = vlaneseq
    %v245 = vshrl.u32 %v244, 7
    %v246 = vsub.s32 0, %v245
    %v247 = vrot.slane %v50, %v246
    %248 = vrot.lane.b32.xlu0 %v247, 96
    %v249 = vpop.permute.xlu0 %248
    %v251 = vmul.f32 %v242, %v249
    %v252 = vmul.f32 %v145, %v241
    %v253 = vadd.f32 %v251, %v252
    %255 = vrot.lane.b32.xlu0 %v253, 32
    %v256 = vpop.permute.xlu0 %255
    %258 = vst.msk [vmem:[#allocation2] sm:$0x1] %vm156, %v256
    %v259 = vld [vmem:[%s7] sm:$0xff]
    %v260 = vld [vmem:[%s7 + $0x8] sm:$0xff]
    %v261 = vld [vmem:[%s7 + $0x10] sm:$0xff]
    %v262 = vld [vmem:[%s7 + $0x18] sm:$0xff]
    %v263 = vld [vmem:[%s8] sm:$0x1]
    %vm264 = vcmask 261120
    %v265 = vsel %vm264, %v253, 0
    %267 = vmatprep.subr.mxu0 0.0
    %268 = vmatpush1.msra.mxu0 0.0
    %269 = vmatprep.subr.mxu0 0.0
    %270 = vmatpush1.msra.mxu0 0.0
    %271 = vmatprep.subr.mxu0 0.0
    %272 = vmatpush1.msra.mxu0 0.0
    %273 = vmatprep.subr.mxu0 0.0
    %274 = vmatpush1.msra.mxu0 0.0
    %275 = vmatprep.subr.mxu0 0.0
    %276 = vmatpush1.msra.mxu0 0.0
    %277 = vmatprep.subr.mxu0 0.0
    %278 = vmatpush1.msra.mxu0 0.0
    %279 = vmatprep.subr.mxu0 0.0
    %280 = vmatpush1.msra.mxu0 0.0
    %281 = vmatprep.subr.mxu0 0.0
    %282 = vmatpush1.msra.mxu0 0.0
    %283 = vmatprep.subr.mxu0 0.0
    %284 = vmatpush1.msra.mxu0 0.0
    %285 = vmatprep.subr.mxu0 0.0
    %286 = vmatpush1.msra.mxu0 0.0
    %287 = vmatprep.subr.mxu0 0.0
    %288 = vmatpush1.msra.mxu0 0.0
    %289 = vmatprep.subr.mxu0 0.0
    %290 = vmatpush1.msra.mxu0 0.0
    %291 = vmatprep.subr.mxu0 0.0
    %292 = vmatpush1.msra.mxu0 %v262
    %293 = vmatprep.subr.mxu0 0.0
    %294 = vmatpush1.msra.mxu0 %v261
    %295 = vmatprep.subr.mxu0 0.0
    %296 = vmatpush1.msra.mxu0 %v260
    %297 = vmatprep.subr.mxu0 0.0
    %298 = vmatpush1.msra.mxu0 %v259
    %299 = vmatprep.subr.mxu0 0.0
    %300 = vmatpush2.msra.mxu0 0.0
    %301 = vmatprep.subr.mxu0 0.0
    %302 = vmatpush2.msra.mxu0 0.0
    %303 = vmatprep.subr.mxu0 0.0
    %304 = vmatpush2.msra.mxu0 0.0
    %305 = vmatprep.subr.mxu0 0.0
    %306 = vmatpush2.msra.mxu0 0.0
    %307 = vmatprep.subr.mxu0 0.0
    %308 = vmatpush2.msra.mxu0 0.0
    %309 = vmatprep.subr.mxu0 0.0
    %310 = vmatpush2.msra.mxu0 0.0
    %311 = vmatprep.subr.mxu0 0.0
    %312 = vmatpush2.msra.mxu0 0.0
    %313 = vmatprep.subr.mxu0 0.0
    %314 = vmatpush2.msra.mxu0 0.0
    %315 = vmatprep.subr.mxu0 0.0
    %316 = vmatpush2.msra.mxu0 0.0
    %317 = vmatprep.subr.mxu0 0.0
    %318 = vmatpush2.msra.mxu0 0.0
    %319 = vmatprep.subr.mxu0 0.0
    %320 = vmatpush2.msra.mxu0 0.0
    %321 = vmatprep.subr.mxu0 0.0
    %322 = vmatpush2.msra.mxu0 0.0
    %323 = vmatprep.subr.mxu0 0.0
    %324 = vmatpush2.msra.mxu0 0.0
    %325 = vmatprep.subr.mxu0 0.0
    %326 = vmatpush2.msra.mxu0 0.0
    %327 = vmatprep.subr.mxu0 0.0
    %328 = vmatpush2.msra.mxu0 0.0
    %329 = vmatprep.subr.mxu0 0.0
    %330 = vmatpush2.msra.mxu0 0.0
    %331 = vmatprep.mubr.f32.mxu0 0.0
    %332 = vmatmul.mubr.f32.gmra.mxu0 %v265
    %v333 = vpop.f32.mrf.mxu0
    %v334 = vadd.f32 %v263, %v333
    %v335 = vpop.f32.mrf.mxu0
    %336 = vdwg.mxu0
    %v337 = vmax.f32 %v334, 0.0
    %vm338 = vcmask 122880
    %339 = vst.msk [vmem:[#allocation6] sm:$0x1] %vm338, %v337
    %340 = vst.msk [vmem:[#allocation8] sm:$0x1] %vm54, %v253
    // Predicated region
    $region38: #{tpu_custom_call.1} parent=1 // pred_check
      _
    $region39: #{tpu_custom_call.1} parent=1 // pred_check_branch
      %342 = sbr.rel (0) target = $region41
    $region40: #{tpu_custom_call.1} parent=1 // pred_region
      %s344 = ssub.s32 16, 16
      %345 = vsyncadd [#allocation7], %s344
      %s347 = sshll.u32 [#allocation6], 4
      %s348 = int_to_ptr.vmem [resolvable:$true] %s347
      %350 = dma.vmem_to_hbm [thread:$0]  %s348, 16, %s9, [#allocation7]
    $region41: #{tpu_custom_call.1} parent=1 // pred_fallthru
      _
    // Predicated region
    $region42: #{tpu_custom_call.1} parent=1 // pred_check
      _
    $region43: #{tpu_custom_call.1} parent=1 // pred_check_branch
      %352 = sbr.rel (0) target = $region45
    $region44: #{tpu_custom_call.1} parent=1 // pred_region
      %s354 = ssub.s32 16, 16
      %355 = vsyncadd [#allocation9], %s354
      %s357 = sshll.u32 [#allocation8], 4
      %s358 = int_to_ptr.vmem [resolvable:$true] %s357
      %360 = dma.vmem_to_hbm [thread:$0]  %s358, 16, %s10, [#allocation9]
    $region45: #{tpu_custom_call.1} parent=1 // pred_fallthru
      _
    // Predicated region
    $region46: #{tpu_custom_call.1} parent=1 // pred_check
      _
    $region47: #{tpu_custom_call.1} parent=1 // pred_check_branch
      %362 = sbr.rel (0) target = $region49
    $region48: #{tpu_custom_call.1} parent=1 // pred_region
      %363 = dma.done [#allocation7], 16
    $region49: #{tpu_custom_call.1} parent=1 // pred_fallthru
      _
    // Predicated region
    $region50: #{tpu_custom_call.1} parent=1 // pred_check
      _
    $region51: #{tpu_custom_call.1} parent=1 // pred_check_branch
      %365 = sbr.rel (0) target = $region53
    $region52: #{tpu_custom_call.1} parent=1 // pred_region
      %366 = dma.done [#allocation9], 16
    $region53: #{tpu_custom_call.1} parent=1 // pred_fallthru
      _
    %367 = vsyncpa [#allocation7], 1
    %368 = vsyncpa [#allocation9], 1

</llo_original>
